<compile_context>
chip_gen: v6e
topology: v6e:2x2x1
jax: 0.10.0
libtpu: 0.0.40
codegen_flags: <defaults>
</compile_context>

<pallas_src>
from functools import lru_cache

import jax
import jax.numpy as jnp
from jax.experimental import pallas as pl
from jax.experimental.pallas import tpu as pltpu


def mlp_kernel(x_ref, w1_ref, b1_ref, w2_ref, b2_ref,
               w3_ref, b3_ref, w4_ref, b4_ref, o_ref):
    # Entire 4-layer MLP runs in VMEM on one resident batch tile.
    # bf16 operands feed the MXU; accumulation / bias / ReLU stay in f32.
    h = x_ref[...]                                              # already bf16
    h = jnp.dot(h, w1_ref[...], preferred_element_type=jnp.float32) + b1_ref[...]
    h = jnp.maximum(h, 0.0).astype(jnp.bfloat16)
    h = jnp.dot(h, w2_ref[...], preferred_element_type=jnp.float32) + b2_ref[...]
    h = jnp.maximum(h, 0.0).astype(jnp.bfloat16)
    h = jnp.dot(h, w3_ref[...], preferred_element_type=jnp.float32) + b3_ref[...]
    h = jnp.maximum(h, 0.0).astype(jnp.bfloat16)
    o_ref[...] = (jnp.dot(h, w4_ref[...], preferred_element_type=jnp.float32)
                  + b4_ref[...]).astype(o_ref.dtype)


def _cdiv(a, b):
    return -(-a // b)


def _round_up(n, m):
    return _cdiv(n, m) * m


def _choose_tiles(B, tb):
    """Balanced tiles: minimize zero-padding (<8 rows/tile) and keep >=2
    parallel grid steps for large batches so v7x megacore shards the grid."""
    n = _cdiv(B, tb)
    if B >= 512 and n < 2:
        n = 2
    tile = _round_up(_cdiv(B, n), 8)
    return tile, tile * n


@lru_cache(maxsize=None)
def _get_call(Bp, tile, F, dims):
    d1, d2, d3, d4 = dims

    def x_map(i):
        return (i, 0)

    def const_map(i):
        # Constant block index => Pallas keeps the weight/bias tiles resident
        # across grid steps (no re-DMA); no special buffering needed.
        return (0, 0)

    in_specs = [pl.BlockSpec((tile, F), x_map)]
    for din, dout in ((F, d1), (d1, d2), (d2, d3), (d3, d4)):
        in_specs.append(pl.BlockSpec((din, dout), const_map))   # weight [in,out]
        in_specs.append(pl.BlockSpec((1, dout), const_map))     # bias   [1,out]

    flops = 2 * Bp * (F * d1 + d1 * d2 + d2 * d3 + d3 * d4)
    bytes_accessed = (
        Bp * F * 2                                              # bf16 input
        + Bp * d4 * 4                                           # f32 output
        + 2 * (F * d1 + d1 * d2 + d2 * d3 + d3 * d4)            # bf16 weights
        + 4 * (d1 + d2 + d3 + d4))                              # f32 biases

    call = pl.pallas_call(
        mlp_kernel,
        out_shape=jax.ShapeDtypeStruct((Bp, d4), jnp.float32),
        grid_spec=pltpu.PrefetchScalarGridSpec(
            num_scalar_prefetch=0,
            grid=(Bp // tile,),
            in_specs=in_specs,
            out_specs=pl.BlockSpec((tile, d4), x_map),
        ),
        compiler_params=pltpu.CompilerParams(
            dimension_semantics=("parallel",),
            vmem_limit_bytes=48 * 1024 * 1024,   # safe on v7x's 64 MiB VMEM
        ),
        cost_estimate=pl.CostEstimate(
            flops=flops, transcendentals=0, bytes_accessed=bytes_accessed),
    )
    return jax.jit(call)


def net_forward(x, params, *, tb=1024):
    """x: [B, F] float (any). params: dict of (w_t, b) per layer, w_t is [in, out] bf16."""
    B, F = x.shape
    (w1, b1), (w2, b2), (w3, b3), (w4, b4) = (
        params["fc1"], params["fc2"], params["fc3"], params["fc4"])
    dims = (w1.shape[1], w2.shape[1], w3.shape[1], w4.shape[1])

    tile, Bp = _choose_tiles(B, tb)

    # Cast to bf16 in the wrapper (halves input DMA / VMEM), pad batch to the
    # balanced tile size.
    x_bf = x.astype(jnp.bfloat16)
    x_p = x_bf if Bp == B else jnp.pad(x_bf, ((0, Bp - B), (0, 0)))

    call = _get_call(Bp, tile, F, dims)
    out = call(x_p, w1, b1, w2, b2, w3, b3, w4, b4)
    return out if Bp == B else out[:B]


def init_linear(key, in_dim, out_dim):
    """nn.Linear-style init U(-1/sqrt(in), 1/sqrt(in)). Weight is returned
    pre-transposed to [in, out] and cast to bf16 (MXU-native); bias stays f32."""
    kw, kb = jax.random.split(key)
    bound = 1.0 / jnp.sqrt(jnp.float32(in_dim))
    w_t = jax.random.uniform(kw, (in_dim, out_dim), jnp.float32, -bound, bound)
    b = jax.random.uniform(kb, (1, out_dim), jnp.float32, -bound, bound)
    return w_t.astype(jnp.bfloat16), b


def make_params(key, input_size):
    # TODO(synk): bn1 (BatchNorm1d) and squash() are defined in the PyTorch
    # module but never used in forward(), so they are intentionally omitted.
    k1, k2, k3, k4 = jax.random.split(key, 4)
    return {
        "fc1": init_linear(k1, input_size, 256),
        "fc2": init_linear(k2, 256, 512),
        "fc3": init_linear(k3, 512, 256),
        "fc4": init_linear(k4, 256, 128),
    }


def net_forward_ref(x, params):
    """Plain-JAX reference matching the kernel's bf16-operand / f32-accum math."""
    h = x.astype(jnp.bfloat16)
    for name in ("fc1", "fc2", "fc3"):
        w, b = params[name]
        h = jnp.dot(h, w, preferred_element_type=jnp.float32) + b
        h = jnp.maximum(h, 0.0).astype(jnp.bfloat16)
    w, b = params["fc4"]
    return jnp.dot(h, w, preferred_element_type=jnp.float32) + b


if __name__ == "__main__":
    key = jax.random.PRNGKey(0)
    kx, kp = jax.random.split(key)

    batch, input_size = 8, 32
    x = jax.random.normal(kx, (batch, input_size), jnp.float32)
    params = make_params(kp, input_size)

    out = net_forward(x, params)
    out = jax.block_until_ready(out)

    ref = net_forward_ref(x, params)
    assert out.shape == (batch, 128)
    assert jnp.allclose(out, ref, atol=1e-3, rtol=1e-3), (
        float(jnp.max(jnp.abs(out - ref))))

    print("KERNEL_OK")
</pallas_src>

<mosaic_0001>
module attributes {stable_mosaic.version = 11 : i64} {
  func.func @mlp_kernel(%arg0: i32, %arg1: memref<8x32xbf16, #tpu.memory_space<vmem>>, %arg2: memref<32x256xbf16, #tpu.memory_space<vmem>>, %arg3: memref<1x256xf32, #tpu.memory_space<vmem>>, %arg4: memref<256x512xbf16, #tpu.memory_space<vmem>>, %arg5: memref<1x512xf32, #tpu.memory_space<vmem>>, %arg6: memref<512x256xbf16, #tpu.memory_space<vmem>>, %arg7: memref<1x256xf32, #tpu.memory_space<vmem>>, %arg8: memref<256x128xbf16, #tpu.memory_space<vmem>>, %arg9: memref<1x128xf32, #tpu.memory_space<vmem>>, %arg10: memref<8x128xf32, #tpu.memory_space<vmem>>) attributes {dimension_semantics = [#tpu.dimension_semantics<parallel>], iteration_bounds = array<i64: 1>, scalar_prefetch = 0 : i64, scratch_operands = 0 : i64, tpu.core_type = #tpu.core_type<tc>, window_params = [{transform_indices = @transform_0, window_bounds = array<i64: 8, 32>}, {pipeline_mode = #tpu.pipeline_mode<synchronous>, transform_indices = @transform_1, window_bounds = array<i64: 32, 256>}, {pipeline_mode = #tpu.pipeline_mode<synchronous>, transform_indices = @transform_2, window_bounds = array<i64: 1, 256>}, {pipeline_mode = #tpu.pipeline_mode<synchronous>, transform_indices = @transform_3, window_bounds = array<i64: 256, 512>}, {pipeline_mode = #tpu.pipeline_mode<synchronous>, transform_indices = @transform_4, window_bounds = array<i64: 1, 512>}, {pipeline_mode = #tpu.pipeline_mode<synchronous>, transform_indices = @transform_5, window_bounds = array<i64: 512, 256>}, {pipeline_mode = #tpu.pipeline_mode<synchronous>, transform_indices = @transform_6, window_bounds = array<i64: 1, 256>}, {pipeline_mode = #tpu.pipeline_mode<synchronous>, transform_indices = @transform_7, window_bounds = array<i64: 256, 128>}, {pipeline_mode = #tpu.pipeline_mode<synchronous>, transform_indices = @transform_8, window_bounds = array<i64: 1, 128>}, {transform_indices = @transform_9, window_bounds = array<i64: 8, 128>}]} {
    %c0 = arith.constant 0 : index
    %c0_0 = arith.constant 0 : index
    %0 = vector.load %arg1[%c0, %c0_0] : memref<8x32xbf16, #tpu.memory_space<vmem>>, vector<8x32xbf16>
    %c0_1 = arith.constant 0 : index
    %c0_2 = arith.constant 0 : index
    %1 = vector.load %arg2[%c0_1, %c0_2] : memref<32x256xbf16, #tpu.memory_space<vmem>>, vector<32x256xbf16>
    %cst = arith.constant dense<0.000000e+00> : vector<8x256xf32>
    %2 = tpu.matmul %0, %1, %cst {dimension_numbers = #tpu.dot_dimension_numbers<[1], [0], [0], [1], [0, 0, 1, 1], [], []>} : vector<8x32xbf16>, vector<32x256xbf16>, vector<8x256xf32> -> vector<8x256xf32>
    %c0_3 = arith.constant 0 : index
    %c0_4 = arith.constant 0 : index
    %3 = vector.load %arg3[%c0_3, %c0_4] : memref<1x256xf32, #tpu.memory_space<vmem>>, vector<1x256xf32>
    %4 = vector.broadcast %3 : vector<1x256xf32> to vector<8x256xf32>
    %5 = arith.addf %2, %4 : vector<8x256xf32>
    %cst_5 = arith.constant 0.000000e+00 : f32
    %6 = vector.broadcast %cst_5 : f32 to vector<8x256xf32>
    %7 = arith.maximumf %5, %6 : vector<8x256xf32>
    %8 = arith.truncf %7 : vector<8x256xf32> to vector<8x256xbf16>
    %c0_6 = arith.constant 0 : index
    %c0_7 = arith.constant 0 : index
    %9 = vector.load %arg4[%c0_6, %c0_7] : memref<256x512xbf16, #tpu.memory_space<vmem>>, vector<256x512xbf16>
    %cst_8 = arith.constant dense<0.000000e+00> : vector<8x512xf32>
    %10 = tpu.matmul %8, %9, %cst_8 {dimension_numbers = #tpu.dot_dimension_numbers<[1], [0], [0], [1], [0, 0, 1, 1], [], []>} : vector<8x256xbf16>, vector<256x512xbf16>, vector<8x512xf32> -> vector<8x512xf32>
    %c0_9 = arith.constant 0 : index
    %c0_10 = arith.constant 0 : index
    %11 = vector.load %arg5[%c0_9, %c0_10] : memref<1x512xf32, #tpu.memory_space<vmem>>, vector<1x512xf32>
    %12 = vector.broadcast %11 : vector<1x512xf32> to vector<8x512xf32>
    %13 = arith.addf %10, %12 : vector<8x512xf32>
    %cst_11 = arith.constant 0.000000e+00 : f32
    %14 = vector.broadcast %cst_11 : f32 to vector<8x512xf32>
    %15 = arith.maximumf %13, %14 : vector<8x512xf32>
    %16 = arith.truncf %15 : vector<8x512xf32> to vector<8x512xbf16>
    %c0_12 = arith.constant 0 : index
    %c0_13 = arith.constant 0 : index
    %17 = vector.load %arg6[%c0_12, %c0_13] : memref<512x256xbf16, #tpu.memory_space<vmem>>, vector<512x256xbf16>
    %cst_14 = arith.constant dense<0.000000e+00> : vector<8x256xf32>
    %18 = tpu.matmul %16, %17, %cst_14 {dimension_numbers = #tpu.dot_dimension_numbers<[1], [0], [0], [1], [0, 0, 1, 1], [], []>} : vector<8x512xbf16>, vector<512x256xbf16>, vector<8x256xf32> -> vector<8x256xf32>
    %c0_15 = arith.constant 0 : index
    %c0_16 = arith.constant 0 : index
    %19 = vector.load %arg7[%c0_15, %c0_16] : memref<1x256xf32, #tpu.memory_space<vmem>>, vector<1x256xf32>
    %20 = vector.broadcast %19 : vector<1x256xf32> to vector<8x256xf32>
    %21 = arith.addf %18, %20 : vector<8x256xf32>
    %cst_17 = arith.constant 0.000000e+00 : f32
    %22 = vector.broadcast %cst_17 : f32 to vector<8x256xf32>
    %23 = arith.maximumf %21, %22 : vector<8x256xf32>
    %24 = arith.truncf %23 : vector<8x256xf32> to vector<8x256xbf16>
    %c0_18 = arith.constant 0 : index
    %c0_19 = arith.constant 0 : index
    %25 = vector.load %arg8[%c0_18, %c0_19] : memref<256x128xbf16, #tpu.memory_space<vmem>>, vector<256x128xbf16>
    %cst_20 = arith.constant dense<0.000000e+00> : vector<8x128xf32>
    %26 = tpu.matmul %24, %25, %cst_20 {dimension_numbers = #tpu.dot_dimension_numbers<[1], [0], [0], [1], [0, 0, 1, 1], [], []>} : vector<8x256xbf16>, vector<256x128xbf16>, vector<8x128xf32> -> vector<8x128xf32>
    %c0_21 = arith.constant 0 : index
    %c0_22 = arith.constant 0 : index
    %27 = vector.load %arg9[%c0_21, %c0_22] : memref<1x128xf32, #tpu.memory_space<vmem>>, vector<1x128xf32>
    %28 = vector.broadcast %27 : vector<1x128xf32> to vector<8x128xf32>
    %29 = arith.addf %26, %28 : vector<8x128xf32>
    %c0_23 = arith.constant 0 : index
    %c0_24 = arith.constant 0 : index
    %30 = vector.load %arg10[%c0_23, %c0_24] : memref<8x128xf32, #tpu.memory_space<vmem>>, vector<8x128xf32>
    tpu.vector_store %arg10[%c0_23, %c0_24], %29 {strides = array<i32>} : memref<8x128xf32, #tpu.memory_space<vmem>>, vector<8x128xf32>,
    return
  }
  func.func @transform_0(%arg0: i32) -> (i32, i32) {
    %c0_i32 = arith.constant 0 : i32
    %c0_i32_0 = arith.constant 0 : i32
    return %arg0, %c0_i32 : i32, i32
  }
  func.func @transform_1(%arg0: i32) -> (i32, i32) {
    %c0_i32 = arith.constant 0 : i32
    %c0_i32_0 = arith.constant 0 : i32
    %c0_i32_1 = arith.constant 0 : i32
    return %c0_i32, %c0_i32_0 : i32, i32
  }
  func.func @transform_2(%arg0: i32) -> (i32, i32) {
    %c0_i32 = arith.constant 0 : i32
    %c0_i32_0 = arith.constant 0 : i32
    %c0_i32_1 = arith.constant 0 : i32
    return %c0_i32, %c0_i32_0 : i32, i32
  }
  func.func @transform_3(%arg0: i32) -> (i32, i32) {
    %c0_i32 = arith.constant 0 : i32
    %c0_i32_0 = arith.constant 0 : i32
    %c0_i32_1 = arith.constant 0 : i32
    return %c0_i32, %c0_i32_0 : i32, i32
  }
  func.func @transform_4(%arg0: i32) -> (i32, i32) {
    %c0_i32 = arith.constant 0 : i32
    %c0_i32_0 = arith.constant 0 : i32
    %c0_i32_1 = arith.constant 0 : i32
    return %c0_i32, %c0_i32_0 : i32, i32
  }
  func.func @transform_5(%arg0: i32) -> (i32, i32) {
    %c0_i32 = arith.constant 0 : i32
    %c0_i32_0 = arith.constant 0 : i32
    %c0_i32_1 = arith.constant 0 : i32
    return %c0_i32, %c0_i32_0 : i32, i32
  }
  func.func @transform_6(%arg0: i32) -> (i32, i32) {
    %c0_i32 = arith.constant 0 : i32
    %c0_i32_0 = arith.constant 0 : i32
    %c0_i32_1 = arith.constant 0 : i32
    return %c0_i32, %c0_i32_0 : i32, i32
  }
  func.func @transform_7(%arg0: i32) -> (i32, i32) {
    %c0_i32 = arith.constant 0 : i32
    %c0_i32_0 = arith.constant 0 : i32
    %c0_i32_1 = arith.constant 0 : i32
    return %c0_i32, %c0_i32_0 : i32, i32
  }
  func.func @transform_8(%arg0: i32) -> (i32, i32) {
    %c0_i32 = arith.constant 0 : i32
    %c0_i32_0 = arith.constant 0 : i32
    %c0_i32_1 = arith.constant 0 : i32
    return %c0_i32, %c0_i32_0 : i32, i32
  }
  func.func @transform_9(%arg0: i32) -> (i32, i32) {
    %c0_i32 = arith.constant 0 : i32
    %c0_i32_0 = arith.constant 0 : i32
    return %arg0, %c0_i32 : i32, i32
  }
}

</mosaic_0001>

<llo_original>
// kernel: tpu_custom_call.1
$region0: #{tpu_custom_call.1}
  #allocation0 [shape = 'u32[]', space=smem, size = 0x4, offset = 0x4, fixed_abs, tag = 'smem constant byte address 0x4 - core index']
  #allocation1 [shape = 'u32[144,128]{1,0:T(1,128)}', space=vmem, size = 0x12000, scoped, tag = 'internal scratch']
  %s0 = inlined_call_operand.hbm [shape: bf16[8,32], index: 0, kind: input, shape index: {}]
  %s1 = inlined_call_operand.hbm [shape: bf16[32,256], index: 1, kind: input, shape index: {}]
  %s2 = inlined_call_operand.vmem [shape: f32[1,256], index: 2, kind: input, shape index: {}]
  %s3 = inlined_call_operand.hbm [shape: bf16[256,512], index: 3, kind: input, shape index: {}]
  %s4 = inlined_call_operand.vmem [shape: f32[1,512], index: 4, kind: input, shape index: {}]
  %s5 = inlined_call_operand.hbm [shape: bf16[512,256], index: 5, kind: input, shape index: {}]
  %s6 = inlined_call_operand.vmem [shape: f32[1,256], index: 6, kind: input, shape index: {}]
  %s7 = inlined_call_operand.hbm [shape: bf16[256,128], index: 7, kind: input, shape index: {}]
  %s8 = inlined_call_operand.vmem [shape: f32[1,128], index: 8, kind: input, shape index: {}]
  %s9 = inlined_call_operand.hbm [shape: f32[8,128], index: 9, kind: output, shape index: {}]
  %s10 = sld [smem:[#allocation0]]
  $region66: #{tpu_custom_call.1} parent=0
    _
  %s12 = ssub.s32 1, %s10
  %s13 = scalar_select 0, %s12, %s10
  $region1: #{tpu_custom_call.1} parent=0
    #allocation2 [shape = 'u8[2048]{0}', space=vmem, size = 0x800, scoped, tag = 'input window, operand 0, single buffered']
    #allocation3 [shape = 's32[1]{0}', space=sflag, size = 0x4, scoped, tag = 'scoped memory for tpu_custom_call.1']
    #allocation4 [shape = 's32[1]{0}', space=sflag, size = 0x4, scoped, tag = 'scoped memory for tpu_custom_call.1']
    #allocation5 [shape = 'u8[16384]{0}', space=vmem, size = 0x4000, scoped, tag = 'input window, operand 1, single buffered']
    #allocation6 [shape = 's32[1]{0}', space=sflag, size = 0x4, scoped, tag = 'scoped memory for tpu_custom_call.1']
    #allocation7 [shape = 'u8[262144]{0}', space=vmem, size = 0x40000, scoped, tag = 'input window, operand 3, single buffered']
    #allocation8 [shape = 'u8[262144]{0}', space=vmem, size = 0x40000, scoped, tag = 'input window, operand 5, single buffered']
    #allocation9 [shape = 's32[1]{0}', space=sflag, size = 0x4, scoped, tag = 'scoped memory for tpu_custom_call.1']
    #allocation10 [shape = 'u8[65536]{0}', space=vmem, size = 0x10000, scoped, tag = 'input window, operand 7, single buffered']
    #allocation11 [shape = 'u8[4096]{0}', space=vmem, size = 0x1000, scoped, tag = 'output window, operand 0, single buffered']
    %14 = vsyncpa [#allocation3], 0
    %15 = vsyncpa [#allocation6], 0
    %16 = vsyncpa [#allocation9], 0
    %17 = vsyncpa [#allocation4], 0
    // Predicated region
    $region2: #{tpu_custom_call.1} parent=1 // pred_check
      _
    $region3: #{tpu_custom_call.1} parent=1 // pred_check_branch
      %19 = sbr.rel (0) target = $region5
    $region4: #{tpu_custom_call.1} parent=1 // pred_region
      %s21 = ssub.s32 64, 64
      %22 = vsyncadd [#allocation3], %s21
      %s24 = sshll.u32 [#allocation2], 4
      %s25 = int_to_ptr.vmem [resolvable:$true] %s24
      %27 = dma.hbm_to_vmem [thread:$0]  %s0, 64, %s25, [#allocation3]
    $region5: #{tpu_custom_call.1} parent=1 // pred_fallthru
      _
    // Predicated region
    $region6: #{tpu_custom_call.1} parent=1 // pred_check
      _
    $region7: #{tpu_custom_call.1} parent=1 // pred_check_branch
      %29 = sbr.rel (0) target = $region9
    $region8: #{tpu_custom_call.1} parent=1 // pred_region
      %s31 = ssub.s32 512, 512
      %32 = vsyncadd [#allocation6], %s31
      %s33 = sshll.u32 [#allocation5], 4
      %s34 = int_to_ptr.vmem [resolvable:$true] %s33
      %39 = dma.hbm_to_vmem [thread:$0]  %s1, 512, %s34, [#allocation6], 128, 128, 8
    $region9: #{tpu_custom_call.1} parent=1 // pred_fallthru
      _
    // Predicated region
    $region10: #{tpu_custom_call.1} parent=1 // pred_check
      _
    $region11: #{tpu_custom_call.1} parent=1 // pred_check_branch
      %41 = sbr.rel (0) target = $region13
    $region12: #{tpu_custom_call.1} parent=1 // pred_region
      _
    $region13: #{tpu_custom_call.1} parent=1 // pred_fallthru
      _
    // Predicated region
    $region14: #{tpu_custom_call.1} parent=1 // pred_check
      _
    $region15: #{tpu_custom_call.1} parent=1 // pred_check_branch
      %43 = sbr.rel (0) target = $region17
    $region16: #{tpu_custom_call.1} parent=1 // pred_region
      %s45 = ssub.s32 8192, 8192
      %46 = vsyncadd [#allocation6], %s45
      %s47 = sshll.u32 [#allocation7], 4
      %s48 = int_to_ptr.vmem [resolvable:$true] %s47
      %53 = dma.hbm_to_vmem [thread:$0]  %s3, 8192, %s48, [#allocation6], 256, 256, 16
    $region17: #{tpu_custom_call.1} parent=1 // pred_fallthru
      _
    // Predicated region
    $region18: #{tpu_custom_call.1} parent=1 // pred_check
      _
    $region19: #{tpu_custom_call.1} parent=1 // pred_check_branch
      %55 = sbr.rel (0) target = $region21
    $region20: #{tpu_custom_call.1} parent=1 // pred_region
      _
    $region21: #{tpu_custom_call.1} parent=1 // pred_fallthru
      _
    // Predicated region
    $region22: #{tpu_custom_call.1} parent=1 // pred_check
      _
    $region23: #{tpu_custom_call.1} parent=1 // pred_check_branch
      %57 = sbr.rel (0) target = $region25
    $region24: #{tpu_custom_call.1} parent=1 // pred_region
      %s59 = ssub.s32 8192, 8192
      %60 = vsyncadd [#allocation9], %s59
      %s61 = sshll.u32 [#allocation8], 4
      %s62 = int_to_ptr.vmem [resolvable:$true] %s61
      %67 = dma.hbm_to_vmem [thread:$0]  %s5, 8192, %s62, [#allocation9], 128, 128, 8
    $region25: #{tpu_custom_call.1} parent=1 // pred_fallthru
      _
    // Predicated region
    $region26: #{tpu_custom_call.1} parent=1 // pred_check
      _
    $region27: #{tpu_custom_call.1} parent=1 // pred_check_branch
      %69 = sbr.rel (0) target = $region29
    $region28: #{tpu_custom_call.1} parent=1 // pred_region
      _
    $region29: #{tpu_custom_call.1} parent=1 // pred_fallthru
      _
    // Predicated region
    $region30: #{tpu_custom_call.1} parent=1 // pred_check
      _
    $region31: #{tpu_custom_call.1} parent=1 // pred_check_branch
      %71 = sbr.rel (0) target = $region33
    $region32: #{tpu_custom_call.1} parent=1 // pred_region
      %s73 = ssub.s32 2048, 2048
      %74 = vsyncadd [#allocation9], %s73
      %s75 = sshll.u32 [#allocation10], 4
      %s76 = int_to_ptr.vmem [resolvable:$true] %s75
      %81 = dma.hbm_to_vmem [thread:$0]  %s7, 2048, %s76, [#allocation9], 64, 64, 4
    $region33: #{tpu_custom_call.1} parent=1 // pred_fallthru
      _
    // Predicated region
    $region34: #{tpu_custom_call.1} parent=1 // pred_check
      _
    $region35: #{tpu_custom_call.1} parent=1 // pred_check_branch
      %83 = sbr.rel (0) target = $region37
    $region36: #{tpu_custom_call.1} parent=1 // pred_region
      _
    $region37: #{tpu_custom_call.1} parent=1 // pred_fallthru
      _
    // Predicated region
    $region38: #{tpu_custom_call.1} parent=1 // pred_check
      _
    $region39: #{tpu_custom_call.1} parent=1 // pred_check_branch
      %85 = sbr.rel (0) target = $region41
    $region40: #{tpu_custom_call.1} parent=1 // pred_region
      %86 = dma.done [#allocation3], 64
    $region41: #{tpu_custom_call.1} parent=1 // pred_fallthru
      _
    // Predicated region
    $region42: #{tpu_custom_call.1} parent=1 // pred_check
      _
    $region43: #{tpu_custom_call.1} parent=1 // pred_check_branch
      %88 = sbr.rel (0) target = $region45
    $region44: #{tpu_custom_call.1} parent=1 // pred_region
      %89 = dma.done [#allocation6], 512
    $region45: #{tpu_custom_call.1} parent=1 // pred_fallthru
      _
    // Predicated region
    $region46: #{tpu_custom_call.1} parent=1 // pred_check
      _
    $region47: #{tpu_custom_call.1} parent=1 // pred_check_branch
      %91 = sbr.rel (0) target = $region49
    $region48: #{tpu_custom_call.1} parent=1 // pred_region
      %92 = dma.done [#allocation6], 8192
    $region49: #{tpu_custom_call.1} parent=1 // pred_fallthru
      _
    // Predicated region
    $region50: #{tpu_custom_call.1} parent=1 // pred_check
      _
    $region51: #{tpu_custom_call.1} parent=1 // pred_check_branch
      %94 = sbr.rel (0) target = $region53
    $region52: #{tpu_custom_call.1} parent=1 // pred_region
      %95 = dma.done [#allocation9], 8192
    $region53: #{tpu_custom_call.1} parent=1 // pred_fallthru
      _
    // Predicated region
    $region54: #{tpu_custom_call.1} parent=1 // pred_check
      _
    $region55: #{tpu_custom_call.1} parent=1 // pred_check_branch
      %97 = sbr.rel (0) target = $region57
    $region56: #{tpu_custom_call.1} parent=1 // pred_region
      %98 = dma.done [#allocation9], 2048
    $region57: #{tpu_custom_call.1} parent=1 // pred_fallthru
      _
    %v100 = vld [vmem:[#allocation2] sm:$0xf]
    %v101 = vld [vmem:[#allocation5] sm:$0xff]
    %v102 = vld [vmem:[#allocation5 + $0x8] sm:$0xff]
    %v103 = vld [vmem:[#allocation5 + $0x10] sm:$0xff]
    %v104 = vld [vmem:[#allocation5 + $0x18] sm:$0xff]
    %v105 = vld [vmem:[%s2] sm:$0x3]
    %v107 = vlaneseq
    %v108 = vshrl.u32 %v107, 7
    %v109 = vsub.s32 0, %v108
    %v110 = vrot.slane %v105, %v109
    %v111 = vlaneseq
    %v112 = vshrl.u32 %v111, 7
    %v113 = vsub.s32 1, %v112
    %v114 = vrot.slane %v105, %v113
    %v121 = vunpack.c.l.b16 %v101
    %v122 = vunpack.c.h.b16 %v101
    %v123 = vunpack.c.l.b16 %v102
    %v124 = vunpack.c.h.b16 %v102
    %v125 = vunpack.c.l.b16 %v103
    %v126 = vunpack.c.h.b16 %v103
    %v127 = vunpack.c.l.b16 %v104
    %v128 = vunpack.c.h.b16 %v104
    %v129 = vpack.c.b16 %v123, %v121
    %v130 = vpack.c.b16 %v124, %v122
    %v131 = vpack.c.b16 %v127, %v125
    %v132 = vpack.c.b16 %v128, %v126
    %vm137 = vcmask 261120
    %v139 = vsel %vm137, %v100, 0
    %141 = vmatprep.subr.bf16.mxu0 0
    %142 = vmatpush1.bf16.msra.mxu0 0
    %143 = vmatprep.subr.bf16.mxu0 0
    %144 = vmatpush1.bf16.msra.mxu0 0
    %145 = vmatprep.subr.bf16.mxu0 0
    %146 = vmatpush1.bf16.msra.mxu0 0
    %147 = vmatprep.subr.bf16.mxu0 0
    %148 = vmatpush1.bf16.msra.mxu0 0
    %149 = vmatprep.subr.bf16.mxu0 0
    %150 = vmatpush1.bf16.msra.mxu0 0
    %151 = vmatprep.subr.bf16.mxu0 0
    %152 = vmatpush1.bf16.msra.mxu0 0
    %153 = vmatprep.subr.bf16.mxu0 %v132
    %154 = vmatpush1.bf16.msra.mxu0 %v131
    %155 = vmatprep.subr.bf16.mxu0 %v130
    %156 = vmatpush1.bf16.msra.mxu0 %v129
    %157 = vmatprep.subr.bf16.mxu0 0
    %158 = vmatpush2.bf16.msra.mxu0 0
    %159 = vmatprep.subr.bf16.mxu0 0
    %160 = vmatpush2.bf16.msra.mxu0 0
    %161 = vmatprep.subr.bf16.mxu0 0
    %162 = vmatpush2.bf16.msra.mxu0 0
    %163 = vmatprep.subr.bf16.mxu0 0
    %164 = vmatpush2.bf16.msra.mxu0 0
    %165 = vmatprep.subr.bf16.mxu0 0
    %166 = vmatpush2.bf16.msra.mxu0 0
    %167 = vmatprep.subr.bf16.mxu0 0
    %168 = vmatpush2.bf16.msra.mxu0 0
    %169 = vmatprep.subr.bf16.mxu0 0
    %170 = vmatpush2.bf16.msra.mxu0 0
    %171 = vmatprep.subr.bf16.mxu0 0
    %172 = vmatpush2.bf16.msra.mxu0 0
    %173 = vmatprep.mubr.bf16.mxu0 0
    %174 = vmatmul.mubr.bf16.gmra.mxu0 %v139
    %v175 = vpop.f32.mrf.mxu0
    %v176 = vadd.f32 %v110, %v175
    %v177 = vpop.f32.mrf.mxu0
    %v178 = vadd.f32 %v114, %v177
    %v179 = vpop.f32.mrf.mxu0
    %v180 = vpop.f32.mrf.mxu0
    %181 = vdwg.mxu0
    %v182 = vmax.f32 %v176, 0.0
    %v183 = vmax.f32 %v178, 0.0
    %v184 = vpack.c.bf16 %v182, %v182
    %v185 = vpack.c.bf16 %v183, %v183
    %v186 = vld [vmem:[#allocation7] sm:$0xff]
    %v187 = vld [vmem:[#allocation7 + $0x8] sm:$0xff]
    %v188 = vld [vmem:[#allocation7 + $0x10] sm:$0xff]
    %v189 = vld [vmem:[#allocation7 + $0x18] sm:$0xff]
    %v190 = vld [vmem:[#allocation7 + $0x20] sm:$0xff]
    %v191 = vld [vmem:[#allocation7 + $0x28] sm:$0xff]
    %v192 = vld [vmem:[#allocation7 + $0x30] sm:$0xff]
    %v193 = vld [vmem:[#allocation7 + $0x38] sm:$0xff]
    %v194 = vld [vmem:[#allocation7 + $0x40] sm:$0xff]
    %v195 = vld [vmem:[#allocation7 + $0x48] sm:$0xff]
    %v196 = vld [vmem:[#allocation7 + $0x50] sm:$0xff]
    %v197 = vld [vmem:[#allocation7 + $0x58] sm:$0xff]
    %v198 = vld [vmem:[#allocation7 + $0x60] sm:$0xff]
    %v199 = vld [vmem:[#allocation7 + $0x68] sm:$0xff]
    %v200 = vld [vmem:[#allocation7 + $0x70] sm:$0xff]
    %v201 = vld [vmem:[#allocation7 + $0x78] sm:$0xff]
    %v202 = vld [vmem:[#allocation7 + $0x80] sm:$0xff]
    %v203 = vld [vmem:[#allocation7 + $0x88] sm:$0xff]
    %v204 = vld [vmem:[#allocation7 + $0x90] sm:$0xff]
    %v205 = vld [vmem:[#allocation7 + $0x98] sm:$0xff]
    %v206 = vld [vmem:[#allocation7 + $0xa0] sm:$0xff]
    %v207 = vld [vmem:[#allocation7 + $0xa8] sm:$0xff]
    %v208 = vld [vmem:[#allocation7 + $0xb0] sm:$0xff]
    %v209 = vld [vmem:[#allocation7 + $0xb8] sm:$0xff]
    %v210 = vld [vmem:[#allocation7 + $0xc0] sm:$0xff]
    %v211 = vld [vmem:[#allocation7 + $0xc8] sm:$0xff]
    %v212 = vld [vmem:[#allocation7 + $0xd0] sm:$0xff]
    %v213 = vld [vmem:[#allocation7 + $0xd8] sm:$0xff]
    %v214 = vld [vmem:[#allocation7 + $0xe0] sm:$0xff]
    %v215 = vld [vmem:[#allocation7 + $0xe8] sm:$0xff]
    %v216 = vld [vmem:[#allocation7 + $0xf0] sm:$0xff]
    %v217 = vld [vmem:[#allocation7 + $0xf8] sm:$0xff]
    %v218 = vld [vmem:[#allocation7 + $0x100] sm:$0xff]
    %v219 = vld [vmem:[#allocation7 + $0x108] sm:$0xff]
    %v220 = vld [vmem:[#allocation7 + $0x110] sm:$0xff]
    %v221 = vld [vmem:[#allocation7 + $0x118] sm:$0xff]
    %v222 = vld [vmem:[#allocation7 + $0x120] sm:$0xff]
    %v223 = vld [vmem:[#allocation7 + $0x128] sm:$0xff]
    %v224 = vld [vmem:[#allocation7 + $0x130] sm:$0xff]
    %v225 = vld [vmem:[#allocation7 + $0x138] sm:$0xff]
    %v226 = vld [vmem:[#allocation7 + $0x140] sm:$0xff]
    %v227 = vld [vmem:[#allocation7 + $0x148] sm:$0xff]
    %v228 = vld [vmem:[#allocation7 + $0x150] sm:$0xff]
    %v229 = vld [vmem:[#allocation7 + $0x158] sm:$0xff]
    %v230 = vld [vmem:[#allocation7 + $0x160] sm:$0xff]
    %v231 = vld [vmem:[#allocation7 + $0x168] sm:$0xff]
    %v232 = vld [vmem:[#allocation7 + $0x170] sm:$0xff]
    %v233 = vld [vmem:[#allocation7 + $0x178] sm:$0xff]
    %v234 = vld [vmem:[#allocation7 + $0x180] sm:$0xff]
    %v235 = vld [vmem:[#allocation7 + $0x188] sm:$0xff]
    %v236 = vld [vmem:[#allocation7 + $0x190] sm:$0xff]
    %v237 = vld [vmem:[#allocation7 + $0x198] sm:$0xff]
    %v238 = vld [vmem:[#allocation7 + $0x1a0] sm:$0xff]
    %v239 = vld [vmem:[#allocation7 + $0x1a8] sm:$0xff]
    %v240 = vld [vmem:[#allocation7 + $0x1b0] sm:$0xff]
    %v241 = vld [vmem:[#allocation7 + $0x1b8] sm:$0xff]
    %v242 = vld [vmem:[#allocation7 + $0x1c0] sm:$0xff]
    %v243 = vld [vmem:[#allocation7 + $0x1c8] sm:$0xff]
    %v244 = vld [vmem:[#allocation7 + $0x1d0] sm:$0xff]
    %v245 = vld [vmem:[#allocation7 + $0x1d8] sm:$0xff]
    %v246 = vld [vmem:[#allocation7 + $0x1e0] sm:$0xff]
    %v247 = vld [vmem:[#allocation7 + $0x1e8] sm:$0xff]
    %v248 = vld [vmem:[#allocation7 + $0x1f0] sm:$0xff]
    %v249 = vld [vmem:[#allocation7 + $0x1f8] sm:$0xff]
    %v250 = vld [vmem:[%s4] sm:$0xf]
    %v252 = vlaneseq
    %v253 = vshrl.u32 %v252, 7
    %v254 = vsub.s32 0, %v253
    %v255 = vrot.slane %v250, %v254
    %v256 = vlaneseq
    %v257 = vshrl.u32 %v256, 7
    %v258 = vsub.s32 1, %v257
    %v259 = vrot.slane %v250, %v258
    %v260 = vlaneseq
    %v261 = vshrl.u32 %v260, 7
    %v262 = vsub.s32 2, %v261
    %v263 = vrot.slane %v250, %v262
    %v264 = vlaneseq
    %v265 = vshrl.u32 %v264, 7
    %v266 = vsub.s32 3, %v265
    %v267 = vrot.slane %v250, %v266
    %v336 = vunpack.c.l.b16 %v186
    %v337 = vunpack.c.h.b16 %v186
    %v338 = vunpack.c.l.b16 %v187
    %v339 = vunpack.c.h.b16 %v187
    %v340 = vunpack.c.l.b16 %v188
    %v341 = vunpack.c.h.b16 %v188
    %v342 = vunpack.c.l.b16 %v189
    %v343 = vunpack.c.h.b16 %v189
    %v344 = vunpack.c.l.b16 %v190
    %v345 = vunpack.c.h.b16 %v190
    %v346 = vunpack.c.l.b16 %v191
    %v347 = vunpack.c.h.b16 %v191
    %v348 = vunpack.c.l.b16 %v192
    %v349 = vunpack.c.h.b16 %v192
    %v350 = vunpack.c.l.b16 %v193
    %v351 = vunpack.c.h.b16 %v193
    %v352 = vunpack.c.l.b16 %v194
    %v353 = vunpack.c.h.b16 %v194
    %v354 = vunpack.c.l.b16 %v195
    %v355 = vunpack.c.h.b16 %v195
    %v356 = vunpack.c.l.b16 %v196
    %v357 = vunpack.c.h.b16 %v196
    %v358 = vunpack.c.l.b16 %v197
    %v359 = vunpack.c.h.b16 %v197
    %v360 = vunpack.c.l.b16 %v198
    %v361 = vunpack.c.h.b16 %v198
    %v362 = vunpack.c.l.b16 %v199
    %v363 = vunpack.c.h.b16 %v199
    %v364 = vunpack.c.l.b16 %v200
    %v365 = vunpack.c.h.b16 %v200
    %v366 = vunpack.c.l.b16 %v201
    %v367 = vunpack.c.h.b16 %v201
    %v368 = vunpack.c.l.b16 %v202
    %v369 = vunpack.c.h.b16 %v202
    %v370 = vunpack.c.l.b16 %v203
    %v371 = vunpack.c.h.b16 %v203
    %v372 = vunpack.c.l.b16 %v204
    %v373 = vunpack.c.h.b16 %v204
    %v374 = vunpack.c.l.b16 %v205
    %v375 = vunpack.c.h.b16 %v205
    %v376 = vunpack.c.l.b16 %v206
    %v377 = vunpack.c.h.b16 %v206
    %v378 = vunpack.c.l.b16 %v207
    %v379 = vunpack.c.h.b16 %v207
    %v380 = vunpack.c.l.b16 %v208
    %v381 = vunpack.c.h.b16 %v208
    %v382 = vunpack.c.l.b16 %v209
    %v383 = vunpack.c.h.b16 %v209
    %v384 = vunpack.c.l.b16 %v210
    %v385 = vunpack.c.h.b16 %v210
    %v386 = vunpack.c.l.b16 %v211
    %v387 = vunpack.c.h.b16 %v211
    %v388 = vunpack.c.l.b16 %v212
    %v389 = vunpack.c.h.b16 %v212
    %v390 = vunpack.c.l.b16 %v213
    %v391 = vunpack.c.h.b16 %v213
    %v392 = vunpack.c.l.b16 %v214
    %v393 = vunpack.c.h.b16 %v214
    %v394 = vunpack.c.l.b16 %v215
    %v395 = vunpack.c.h.b16 %v215
    %v396 = vunpack.c.l.b16 %v216
    %v397 = vunpack.c.h.b16 %v216
    %v398 = vunpack.c.l.b16 %v217
    %v399 = vunpack.c.h.b16 %v217
    %v400 = vunpack.c.l.b16 %v218
    %v401 = vunpack.c.h.b16 %v218
    %v402 = vunpack.c.l.b16 %v219
    %v403 = vunpack.c.h.b16 %v219
    %v404 = vunpack.c.l.b16 %v220
    %v405 = vunpack.c.h.b16 %v220
    %v406 = vunpack.c.l.b16 %v221
    %v407 = vunpack.c.h.b16 %v221
    %v408 = vunpack.c.l.b16 %v222
    %v409 = vunpack.c.h.b16 %v222
    %v410 = vunpack.c.l.b16 %v223
    %v411 = vunpack.c.h.b16 %v223
    %v412 = vunpack.c.l.b16 %v224
    %v413 = vunpack.c.h.b16 %v224
    %v414 = vunpack.c.l.b16 %v225
    %v415 = vunpack.c.h.b16 %v225
    %v416 = vunpack.c.l.b16 %v226
    %v417 = vunpack.c.h.b16 %v226
    %v418 = vunpack.c.l.b16 %v227
    %v419 = vunpack.c.h.b16 %v227
    %v420 = vunpack.c.l.b16 %v228
    %v421 = vunpack.c.h.b16 %v228
    %v422 = vunpack.c.l.b16 %v229
    %v423 = vunpack.c.h.b16 %v229
    %v424 = vunpack.c.l.b16 %v230
    %v425 = vunpack.c.h.b16 %v230
    %v426 = vunpack.c.l.b16 %v231
    %v427 = vunpack.c.h.b16 %v231
    %v428 = vunpack.c.l.b16 %v232
    %v429 = vunpack.c.h.b16 %v232
    %v430 = vunpack.c.l.b16 %v233
    %v431 = vunpack.c.h.b16 %v233
    %v432 = vunpack.c.l.b16 %v234
    %v433 = vunpack.c.h.b16 %v234
    %v434 = vunpack.c.l.b16 %v235
    %v435 = vunpack.c.h.b16 %v235
    %v436 = vunpack.c.l.b16 %v236
    %v437 = vunpack.c.h.b16 %v236
    %v438 = vunpack.c.l.b16 %v237
    %v439 = vunpack.c.h.b16 %v237
    %v440 = vunpack.c.l.b16 %v238
    %v441 = vunpack.c.h.b16 %v238
    %v442 = vunpack.c.l.b16 %v239
    %v443 = vunpack.c.h.b16 %v239
    %v444 = vunpack.c.l.b16 %v240
    %v445 = vunpack.c.h.b16 %v240
    %v446 = vunpack.c.l.b16 %v241
    %v447 = vunpack.c.h.b16 %v241
    %v448 = vunpack.c.l.b16 %v242
    %v449 = vunpack.c.h.b16 %v242
    %v450 = vunpack.c.l.b16 %v243
    %v451 = vunpack.c.h.b16 %v243
    %v452 = vunpack.c.l.b16 %v244
    %v453 = vunpack.c.h.b16 %v244
    %v454 = vunpack.c.l.b16 %v245
    %v455 = vunpack.c.h.b16 %v245
    %v456 = vunpack.c.l.b16 %v246
    %v457 = vunpack.c.h.b16 %v246
    %v458 = vunpack.c.l.b16 %v247
    %v459 = vunpack.c.h.b16 %v247
    %v460 = vunpack.c.l.b16 %v248
    %v461 = vunpack.c.h.b16 %v248
    %v462 = vunpack.c.l.b16 %v249
    %v463 = vunpack.c.h.b16 %v249
    %v464 = vpack.c.b16 %v340, %v336
    %v465 = vpack.c.b16 %v341, %v337
    %v466 = vpack.c.b16 %v342, %v338
    %v467 = vpack.c.b16 %v343, %v339
    %v468 = vpack.c.b16 %v348, %v344
    %v469 = vpack.c.b16 %v349, %v345
    %v470 = vpack.c.b16 %v350, %v346
    %v471 = vpack.c.b16 %v351, %v347
    %v472 = vpack.c.b16 %v356, %v352
    %v473 = vpack.c.b16 %v357, %v353
    %v474 = vpack.c.b16 %v358, %v354
    %v475 = vpack.c.b16 %v359, %v355
    %v476 = vpack.c.b16 %v364, %v360
    %v477 = vpack.c.b16 %v365, %v361
    %v478 = vpack.c.b16 %v366, %v362
    %v479 = vpack.c.b16 %v367, %v363
    %v480 = vpack.c.b16 %v372, %v368
    %v481 = vpack.c.b16 %v373, %v369
    %v482 = vpack.c.b16 %v374, %v370
    %v483 = vpack.c.b16 %v375, %v371
    %v484 = vpack.c.b16 %v380, %v376
    %v485 = vpack.c.b16 %v381, %v377
    %v486 = vpack.c.b16 %v382, %v378
    %v487 = vpack.c.b16 %v383, %v379
    %v488 = vpack.c.b16 %v388, %v384
    %v489 = vpack.c.b16 %v389, %v385
    %v490 = vpack.c.b16 %v390, %v386
    %v491 = vpack.c.b16 %v391, %v387
    %v492 = vpack.c.b16 %v396, %v392
    %v493 = vpack.c.b16 %v397, %v393
    %v494 = vpack.c.b16 %v398, %v394
    %v495 = vpack.c.b16 %v399, %v395
    %v496 = vpack.c.b16 %v404, %v400
    %v497 = vpack.c.b16 %v405, %v401
    %v498 = vpack.c.b16 %v406, %v402
    %v499 = vpack.c.b16 %v407, %v403
    %v500 = vpack.c.b16 %v412, %v408
    %v501 = vpack.c.b16 %v413, %v409
    %v502 = vpack.c.b16 %v414, %v410
    %v503 = vpack.c.b16 %v415, %v411
    %v504 = vpack.c.b16 %v420, %v416
    %v505 = vpack.c.b16 %v421, %v417
    %v506 = vpack.c.b16 %v422, %v418
    %v507 = vpack.c.b16 %v423, %v419
    %v508 = vpack.c.b16 %v428, %v424
    %v509 = vpack.c.b16 %v429, %v425
    %v510 = vpack.c.b16 %v430, %v426
    %v511 = vpack.c.b16 %v431, %v427
    %v512 = vpack.c.b16 %v436, %v432
    %v513 = vpack.c.b16 %v437, %v433
    %v514 = vpack.c.b16 %v438, %v434
    %v515 = vpack.c.b16 %v439, %v435
    %v516 = vpack.c.b16 %v444, %v440
    %v517 = vpack.c.b16 %v445, %v441
    %v518 = vpack.c.b16 %v446, %v442
    %v519 = vpack.c.b16 %v447, %v443
    %v520 = vpack.c.b16 %v452, %v448
    %v521 = vpack.c.b16 %v453, %v449
    %v522 = vpack.c.b16 %v454, %v450
    %v523 = vpack.c.b16 %v455, %v451
    %v524 = vpack.c.b16 %v460, %v456
    %v525 = vpack.c.b16 %v461, %v457
    %v526 = vpack.c.b16 %v462, %v458
    %v527 = vpack.c.b16 %v463, %v459
    %592 = vmatprep.subr.bf16.mxu0 %v493
    %593 = vmatpush1.bf16.msra.mxu0 %v492
    %594 = vmatprep.subr.bf16.mxu0 %v489
    %595 = vmatpush1.bf16.msra.mxu0 %v488
    %596 = vmatprep.subr.bf16.mxu0 %v485
    %597 = vmatpush1.bf16.msra.mxu0 %v484
    %598 = vmatprep.subr.bf16.mxu0 %v481
    %599 = vmatpush1.bf16.msra.mxu0 %v480
    %600 = vmatprep.subr.bf16.mxu0 %v477
    %601 = vmatpush1.bf16.msra.mxu0 %v476
    %602 = vmatprep.subr.bf16.mxu0 %v473
    %603 = vmatpush1.bf16.msra.mxu0 %v472
    %604 = vmatprep.subr.bf16.mxu0 %v469
    %605 = vmatpush1.bf16.msra.mxu0 %v468
    %606 = vmatprep.subr.bf16.mxu0 %v465
    %607 = vmatpush1.bf16.msra.mxu0 %v464
    %608 = vmatprep.subr.bf16.mxu0 %v525
    %609 = vmatpush2.bf16.msra.mxu0 %v524
    %610 = vmatprep.subr.bf16.mxu0 %v521
    %611 = vmatpush2.bf16.msra.mxu0 %v520
    %612 = vmatprep.subr.bf16.mxu0 %v517
    %613 = vmatpush2.bf16.msra.mxu0 %v516
    %614 = vmatprep.subr.bf16.mxu0 %v513
    %615 = vmatpush2.bf16.msra.mxu0 %v512
    %616 = vmatprep.subr.bf16.mxu0 %v509
    %617 = vmatpush2.bf16.msra.mxu0 %v508
    %618 = vmatprep.subr.bf16.mxu0 %v505
    %619 = vmatpush2.bf16.msra.mxu0 %v504
    %620 = vmatprep.subr.bf16.mxu0 %v501
    %621 = vmatpush2.bf16.msra.mxu0 %v500
    %622 = vmatprep.subr.bf16.mxu0 %v497
    %623 = vmatpush2.bf16.msra.mxu0 %v496
    %624 = vmatprep.mubr.bf16.mxu0 %v185
    %625 = vmatmul.mubr.bf16.gmra.mxu0 %v184
    %v626 = vpop.f32.mrf.mxu0
    %v627 = vadd.f32 %v255, %v626
    %v628 = vpop.f32.mrf.mxu0
    %v629 = vadd.f32 %v259, %v628
    %v630 = vpop.f32.mrf.mxu0
    %v631 = vpop.f32.mrf.mxu0
    %632 = vdwg.mxu0
    %633 = vmatprep.subr.bf16.mxu0 %v495
    %634 = vmatpush1.bf16.msra.mxu0 %v494
    %635 = vmatprep.subr.bf16.mxu0 %v491
    %636 = vmatpush1.bf16.msra.mxu0 %v490
    %637 = vmatprep.subr.bf16.mxu0 %v487
    %638 = vmatpush1.bf16.msra.mxu0 %v486
    %639 = vmatprep.subr.bf16.mxu0 %v483
    %640 = vmatpush1.bf16.msra.mxu0 %v482
    %641 = vmatprep.subr.bf16.mxu0 %v479
    %642 = vmatpush1.bf16.msra.mxu0 %v478
    %643 = vmatprep.subr.bf16.mxu0 %v475
    %644 = vmatpush1.bf16.msra.mxu0 %v474
    %645 = vmatprep.subr.bf16.mxu0 %v471
    %646 = vmatpush1.bf16.msra.mxu0 %v470
    %647 = vmatprep.subr.bf16.mxu0 %v467
    %648 = vmatpush1.bf16.msra.mxu0 %v466
    %649 = vmatprep.subr.bf16.mxu0 %v527
    %650 = vmatpush2.bf16.msra.mxu0 %v526
    %651 = vmatprep.subr.bf16.mxu0 %v523
    %652 = vmatpush2.bf16.msra.mxu0 %v522
    %653 = vmatprep.subr.bf16.mxu0 %v519
    %654 = vmatpush2.bf16.msra.mxu0 %v518
    %655 = vmatprep.subr.bf16.mxu0 %v515
    %656 = vmatpush2.bf16.msra.mxu0 %v514
    %657 = vmatprep.subr.bf16.mxu0 %v511
    %658 = vmatpush2.bf16.msra.mxu0 %v510
    %659 = vmatprep.subr.bf16.mxu0 %v507
    %660 = vmatpush2.bf16.msra.mxu0 %v506
    %661 = vmatprep.subr.bf16.mxu0 %v503
    %662 = vmatpush2.bf16.msra.mxu0 %v502
    %663 = vmatprep.subr.bf16.mxu0 %v499
    %664 = vmatpush2.bf16.msra.mxu0 %v498
    %665 = vmatprep.mubr.bf16.mxu0 %v185
    %666 = vmatmul.mubr.bf16.gmra.mxu0 %v184
    %v667 = vpop.f32.mrf.mxu0
    %v668 = vadd.f32 %v263, %v667
    %v669 = vpop.f32.mrf.mxu0
    %v670 = vadd.f32 %v267, %v669
    %v671 = vpop.f32.mrf.mxu0
    %v672 = vpop.f32.mrf.mxu0
    %673 = vdwg.mxu0
    %v674 = vmax.f32 %v627, 0.0
    %v675 = vmax.f32 %v629, 0.0
    %v676 = vmax.f32 %v668, 0.0
    %v677 = vmax.f32 %v670, 0.0
    %v678 = vpack.c.bf16 %v674, %v674
    %v679 = vpack.c.bf16 %v675, %v675
    %v680 = vpack.c.bf16 %v676, %v676
    %v681 = vpack.c.bf16 %v677, %v677
    %v682 = vld [vmem:[#allocation8] sm:$0xff]
    %v683 = vld [vmem:[#allocation8 + $0x8] sm:$0xff]
    %v684 = vld [vmem:[#allocation8 + $0x10] sm:$0xff]
    %v685 = vld [vmem:[#allocation8 + $0x18] sm:$0xff]
    %v686 = vld [vmem:[#allocation8 + $0x20] sm:$0xff]
    %v687 = vld [vmem:[#allocation8 + $0x28] sm:$0xff]
    %v688 = vld [vmem:[#allocation8 + $0x30] sm:$0xff]
    %v689 = vld [vmem:[#allocation8 + $0x38] sm:$0xff]
    %v690 = vld [vmem:[#allocation8 + $0x40] sm:$0xff]
    %v691 = vld [vmem:[#allocation8 + $0x48] sm:$0xff]
    %v692 = vld [vmem:[#allocation8 + $0x50] sm:$0xff]
    %v693 = vld [vmem:[#allocation8 + $0x58] sm:$0xff]
    %v694 = vld [vmem:[#allocation8 + $0x60] sm:$0xff]
    %v695 = vld [vmem:[#allocation8 + $0x68] sm:$0xff]
    %v696 = vld [vmem:[#allocation8 + $0x70] sm:$0xff]
    %v697 = vld [vmem:[#allocation8 + $0x78] sm:$0xff]
    %v698 = vld [vmem:[#allocation8 + $0x80] sm:$0xff]
    %v699 = vld [vmem:[#allocation8 + $0x88] sm:$0xff]
    %v700 = vld [vmem:[#allocation8 + $0x90] sm:$0xff]
    %v701 = vld [vmem:[#allocation8 + $0x98] sm:$0xff]
    %v702 = vld [vmem:[#allocation8 + $0xa0] sm:$0xff]
    %v703 = vld [vmem:[#allocation8 + $0xa8] sm:$0xff]
    %v704 = vld [vmem:[#allocation8 + $0xb0] sm:$0xff]
    %v705 = vld [vmem:[#allocation8 + $0xb8] sm:$0xff]
    %v706 = vld [vmem:[#allocation8 + $0xc0] sm:$0xff]
    %v707 = vld [vmem:[#allocation8 + $0xc8] sm:$0xff]
    %v708 = vld [vmem:[#allocation8 + $0xd0] sm:$0xff]
    %v709 = vld [vmem:[#allocation8 + $0xd8] sm:$0xff]
    %v710 = vld [vmem:[#allocation8 + $0xe0] sm:$0xff]
    %v711 = vld [vmem:[#allocation8 + $0xe8] sm:$0xff]
    %v712 = vld [vmem:[#allocation8 + $0xf0] sm:$0xff]
    %v713 = vld [vmem:[#allocation8 + $0xf8] sm:$0xff]
    %v714 = vld [vmem:[#allocation8 + $0x100] sm:$0xff]
    %v715 = vld [vmem:[#allocation8 + $0x108] sm:$0xff]
    %v716 = vld [vmem:[#allocation8 + $0x110] sm:$0xff]
    %v717 = vld [vmem:[#allocation8 + $0x118] sm:$0xff]
    %v718 = vld [vmem:[#allocation8 + $0x120] sm:$0xff]
    %v719 = vld [vmem:[#allocation8 + $0x128] sm:$0xff]
    %v720 = vld [vmem:[#allocation8 + $0x130] sm:$0xff]
    %v721 = vld [vmem:[#allocation8 + $0x138] sm:$0xff]
    %v722 = vld [vmem:[#allocation8 + $0x140] sm:$0xff]
    %v723 = vld [vmem:[#allocation8 + $0x148] sm:$0xff]
    %v724 = vld [vmem:[#allocation8 + $0x150] sm:$0xff]
    %v725 = vld [vmem:[#allocation8 + $0x158] sm:$0xff]
    %v726 = vld [vmem:[#allocation8 + $0x160] sm:$0xff]
    %v727 = vld [vmem:[#allocation8 + $0x168] sm:$0xff]
    %v728 = vld [vmem:[#allocation8 + $0x170] sm:$0xff]
    %v729 = vld [vmem:[#allocation8 + $0x178] sm:$0xff]
    %v730 = vld [vmem:[#allocation8 + $0x180] sm:$0xff]
    %v731 = vld [vmem:[#allocation8 + $0x188] sm:$0xff]
    %v732 = vld [vmem:[#allocation8 + $0x190] sm:$0xff]
    %v733 = vld [vmem:[#allocation8 + $0x198] sm:$0xff]
    %v734 = vld [vmem:[#allocation8 + $0x1a0] sm:$0xff]
    %v735 = vld [vmem:[#allocation8 + $0x1a8] sm:$0xff]
    %v736 = vld [vmem:[#allocation8 + $0x1b0] sm:$0xff]
    %v737 = vld [vmem:[#allocation8 + $0x1b8] sm:$0xff]
    %v738 = vld [vmem:[#allocation8 + $0x1c0] sm:$0xff]
    %v739 = vld [vmem:[#allocation8 + $0x1c8] sm:$0xff]
    %v740 = vld [vmem:[#allocation8 + $0x1d0] sm:$0xff]
    %v741 = vld [vmem:[#allocation8 + $0x1d8] sm:$0xff]
    %v742 = vld [vmem:[#allocation8 + $0x1e0] sm:$0xff]
    %v743 = vld [vmem:[#allocation8 + $0x1e8] sm:$0xff]
    %v744 = vld [vmem:[#allocation8 + $0x1f0] sm:$0xff]
    %v745 = vld [vmem:[#allocation8 + $0x1f8] sm:$0xff]
    %v746 = vld [vmem:[%s6] sm:$0x3]
    %v748 = vlaneseq
    %v749 = vshrl.u32 %v748, 7
    %v750 = vsub.s32 0, %v749
    %v751 = vrot.slane %v746, %v750
    %v752 = vlaneseq
    %v753 = vshrl.u32 %v752, 7
    %v754 = vsub.s32 1, %v753
    %v755 = vrot.slane %v746, %v754
    %v822 = vunpack.c.l.b16 %v682
    %v823 = vunpack.c.h.b16 %v682
    %v824 = vunpack.c.l.b16 %v683
    %v825 = vunpack.c.h.b16 %v683
    %v826 = vunpack.c.l.b16 %v684
    %v827 = vunpack.c.h.b16 %v684
    %v828 = vunpack.c.l.b16 %v685
    %v829 = vunpack.c.h.b16 %v685
    %v830 = vunpack.c.l.b16 %v686
    %v831 = vunpack.c.h.b16 %v686
    %v832 = vunpack.c.l.b16 %v687
    %v833 = vunpack.c.h.b16 %v687
    %v834 = vunpack.c.l.b16 %v688
    %v835 = vunpack.c.h.b16 %v688
    %v836 = vunpack.c.l.b16 %v689
    %v837 = vunpack.c.h.b16 %v689
    %v838 = vunpack.c.l.b16 %v690
    %v839 = vunpack.c.h.b16 %v690
    %v840 = vunpack.c.l.b16 %v691
    %v841 = vunpack.c.h.b16 %v691
    %v842 = vunpack.c.l.b16 %v692
    %v843 = vunpack.c.h.b16 %v692
    %v844 = vunpack.c.l.b16 %v693
    %v845 = vunpack.c.h.b16 %v693
    %v846 = vunpack.c.l.b16 %v694
    %v847 = vunpack.c.h.b16 %v694
    %v848 = vunpack.c.l.b16 %v695
    %v849 = vunpack.c.h.b16 %v695
    %v850 = vunpack.c.l.b16 %v696
    %v851 = vunpack.c.h.b16 %v696
    %v852 = vunpack.c.l.b16 %v697
    %v853 = vunpack.c.h.b16 %v697
    %v854 = vunpack.c.l.b16 %v698
    %v855 = vunpack.c.h.b16 %v698
    %v856 = vunpack.c.l.b16 %v699
    %v857 = vunpack.c.h.b16 %v699
    %v858 = vunpack.c.l.b16 %v700
    %v859 = vunpack.c.h.b16 %v700
    %v860 = vunpack.c.l.b16 %v701
    %v861 = vunpack.c.h.b16 %v701
    %v862 = vunpack.c.l.b16 %v702
    %v863 = vunpack.c.h.b16 %v702
    %v864 = vunpack.c.l.b16 %v703
    %v865 = vunpack.c.h.b16 %v703
    %v866 = vunpack.c.l.b16 %v704
    %v867 = vunpack.c.h.b16 %v704
    %v868 = vunpack.c.l.b16 %v705
    %v869 = vunpack.c.h.b16 %v705
    %v870 = vunpack.c.l.b16 %v706
    %v871 = vunpack.c.h.b16 %v706
    %v872 = vunpack.c.l.b16 %v707
    %v873 = vunpack.c.h.b16 %v707
    %v874 = vunpack.c.l.b16 %v708
    %v875 = vunpack.c.h.b16 %v708
    %v876 = vunpack.c.l.b16 %v709
    %v877 = vunpack.c.h.b16 %v709
    %v878 = vunpack.c.l.b16 %v710
    %v879 = vunpack.c.h.b16 %v710
    %v880 = vunpack.c.l.b16 %v711
    %v881 = vunpack.c.h.b16 %v711
    %v882 = vunpack.c.l.b16 %v712
    %v883 = vunpack.c.h.b16 %v712
    %v884 = vunpack.c.l.b16 %v713
    %v885 = vunpack.c.h.b16 %v713
    %v886 = vunpack.c.l.b16 %v714
    %v887 = vunpack.c.h.b16 %v714
    %v888 = vunpack.c.l.b16 %v715
    %v889 = vunpack.c.h.b16 %v715
    %v890 = vunpack.c.l.b16 %v716
    %v891 = vunpack.c.h.b16 %v716
    %v892 = vunpack.c.l.b16 %v717
    %v893 = vunpack.c.h.b16 %v717
    %v894 = vunpack.c.l.b16 %v718
    %v895 = vunpack.c.h.b16 %v718
    %v896 = vunpack.c.l.b16 %v719
    %v897 = vunpack.c.h.b16 %v719
    %v898 = vunpack.c.l.b16 %v720
    %v899 = vunpack.c.h.b16 %v720
    %v900 = vunpack.c.l.b16 %v721
    %v901 = vunpack.c.h.b16 %v721
    %v902 = vunpack.c.l.b16 %v722
    %v903 = vunpack.c.h.b16 %v722
    %v904 = vunpack.c.l.b16 %v723
    %v905 = vunpack.c.h.b16 %v723
    %v906 = vunpack.c.l.b16 %v724
    %v907 = vunpack.c.h.b16 %v724
    %v908 = vunpack.c.l.b16 %v725
    %v909 = vunpack.c.h.b16 %v725
    %v910 = vunpack.c.l.b16 %v726
    %v911 = vunpack.c.h.b16 %v726
    %v912 = vunpack.c.l.b16 %v727
    %v913 = vunpack.c.h.b16 %v727
    %v914 = vunpack.c.l.b16 %v728
    %v915 = vunpack.c.h.b16 %v728
    %v916 = vunpack.c.l.b16 %v729
    %v917 = vunpack.c.h.b16 %v729
    %v918 = vunpack.c.l.b16 %v730
    %v919 = vunpack.c.h.b16 %v730
    %v920 = vunpack.c.l.b16 %v731
    %v921 = vunpack.c.h.b16 %v731
    %v922 = vunpack.c.l.b16 %v732
    %v923 = vunpack.c.h.b16 %v732
    %v924 = vunpack.c.l.b16 %v733
    %v925 = vunpack.c.h.b16 %v733
    %v926 = vunpack.c.l.b16 %v734
    %v927 = vunpack.c.h.b16 %v734
    %v928 = vunpack.c.l.b16 %v735
    %v929 = vunpack.c.h.b16 %v735
    %v930 = vunpack.c.l.b16 %v736
    %v931 = vunpack.c.h.b16 %v736
    %v932 = vunpack.c.l.b16 %v737
    %v933 = vunpack.c.h.b16 %v737
    %v934 = vunpack.c.l.b16 %v738
    %v935 = vunpack.c.h.b16 %v738
    %v936 = vunpack.c.l.b16 %v739
    %v937 = vunpack.c.h.b16 %v739
    %v938 = vunpack.c.l.b16 %v740
    %v939 = vunpack.c.h.b16 %v740
    %v940 = vunpack.c.l.b16 %v741
    %v941 = vunpack.c.h.b16 %v741
    %v942 = vunpack.c.l.b16 %v742
    %v943 = vunpack.c.h.b16 %v742
    %v944 = vunpack.c.l.b16 %v743
    %v945 = vunpack.c.h.b16 %v743
    %v946 = vunpack.c.l.b16 %v744
    %v947 = vunpack.c.h.b16 %v744
    %v948 = vunpack.c.l.b16 %v745
    %v949 = vunpack.c.h.b16 %v745
    %v950 = vpack.c.b16 %v824, %v822
    %v951 = vpack.c.b16 %v825, %v823
    %v952 = vpack.c.b16 %v828, %v826
    %v953 = vpack.c.b16 %v829, %v827
    %v954 = vpack.c.b16 %v832, %v830
    %v955 = vpack.c.b16 %v833, %v831
    %v956 = vpack.c.b16 %v836, %v834
    %v957 = vpack.c.b16 %v837, %v835
    %v958 = vpack.c.b16 %v840, %v838
    %v959 = vpack.c.b16 %v841, %v839
    %v960 = vpack.c.b16 %v844, %v842
    %v961 = vpack.c.b16 %v845, %v843
    %v962 = vpack.c.b16 %v848, %v846
    %v963 = vpack.c.b16 %v849, %v847
    %v964 = vpack.c.b16 %v852, %v850
    %v965 = vpack.c.b16 %v853, %v851
    %v966 = vpack.c.b16 %v856, %v854
    %v967 = vpack.c.b16 %v857, %v855
    %v968 = vpack.c.b16 %v860, %v858
    %v969 = vpack.c.b16 %v861, %v859
    %v970 = vpack.c.b16 %v864, %v862
    %v971 = vpack.c.b16 %v865, %v863
    %v972 = vpack.c.b16 %v868, %v866
    %v973 = vpack.c.b16 %v869, %v867
    %v974 = vpack.c.b16 %v872, %v870
    %v975 = vpack.c.b16 %v873, %v871
    %v976 = vpack.c.b16 %v876, %v874
    %v977 = vpack.c.b16 %v877, %v875
    %v978 = vpack.c.b16 %v880, %v878
    %v979 = vpack.c.b16 %v881, %v879
    %v980 = vpack.c.b16 %v884, %v882
    %v981 = vpack.c.b16 %v885, %v883
    %v982 = vpack.c.b16 %v888, %v886
    %v983 = vpack.c.b16 %v889, %v887
    %v984 = vpack.c.b16 %v892, %v890
    %v985 = vpack.c.b16 %v893, %v891
    %v986 = vpack.c.b16 %v896, %v894
    %v987 = vpack.c.b16 %v897, %v895
    %v988 = vpack.c.b16 %v900, %v898
    %v989 = vpack.c.b16 %v901, %v899
    %v990 = vpack.c.b16 %v904, %v902
    %v991 = vpack.c.b16 %v905, %v903
    %v992 = vpack.c.b16 %v908, %v906
    %v993 = vpack.c.b16 %v909, %v907
    %v994 = vpack.c.b16 %v912, %v910
    %v995 = vpack.c.b16 %v913, %v911
    %v996 = vpack.c.b16 %v916, %v914
    %v997 = vpack.c.b16 %v917, %v915
    %v998 = vpack.c.b16 %v920, %v918
    %v999 = vpack.c.b16 %v921, %v919
    %v1000 = vpack.c.b16 %v924, %v922
    %v1001 = vpack.c.b16 %v925, %v923
    %v1002 = vpack.c.b16 %v928, %v926
    %v1003 = vpack.c.b16 %v929, %v927
    %v1004 = vpack.c.b16 %v932, %v930
    %v1005 = vpack.c.b16 %v933, %v931
    %v1006 = vpack.c.b16 %v936, %v934
    %v1007 = vpack.c.b16 %v937, %v935
    %v1008 = vpack.c.b16 %v940, %v938
    %v1009 = vpack.c.b16 %v941, %v939
    %v1010 = vpack.c.b16 %v944, %v942
    %v1011 = vpack.c.b16 %v945, %v943
    %v1012 = vpack.c.b16 %v948, %v946
    %v1013 = vpack.c.b16 %v949, %v947
    %1078 = vmatprep.subr.bf16.mxu0 %v965
    %1079 = vmatpush1.bf16.msra.mxu0 %v964
    %1080 = vmatprep.subr.bf16.mxu0 %v963
    %1081 = vmatpush1.bf16.msra.mxu0 %v962
    %1082 = vmatprep.subr.bf16.mxu0 %v961
    %1083 = vmatpush1.bf16.msra.mxu0 %v960
    %1084 = vmatprep.subr.bf16.mxu0 %v959
    %1085 = vmatpush1.bf16.msra.mxu0 %v958
    %1086 = vmatprep.subr.bf16.mxu0 %v957
    %1087 = vmatpush1.bf16.msra.mxu0 %v956
    %1088 = vmatprep.subr.bf16.mxu0 %v955
    %1089 = vmatpush1.bf16.msra.mxu0 %v954
    %1090 = vmatprep.subr.bf16.mxu0 %v953
    %1091 = vmatpush1.bf16.msra.mxu0 %v952
    %1092 = vmatprep.subr.bf16.mxu0 %v951
    %1093 = vmatpush1.bf16.msra.mxu0 %v950
    %1094 = vmatprep.subr.bf16.mxu0 %v981
    %1095 = vmatpush2.bf16.msra.mxu0 %v980
    %1096 = vmatprep.subr.bf16.mxu0 %v979
    %1097 = vmatpush2.bf16.msra.mxu0 %v978
    %1098 = vmatprep.subr.bf16.mxu0 %v977
    %1099 = vmatpush2.bf16.msra.mxu0 %v976
    %1100 = vmatprep.subr.bf16.mxu0 %v975
    %1101 = vmatpush2.bf16.msra.mxu0 %v974
    %1102 = vmatprep.subr.bf16.mxu0 %v973
    %1103 = vmatpush2.bf16.msra.mxu0 %v972
    %1104 = vmatprep.subr.bf16.mxu0 %v971
    %1105 = vmatpush2.bf16.msra.mxu0 %v970
    %1106 = vmatprep.subr.bf16.mxu0 %v969
    %1107 = vmatpush2.bf16.msra.mxu0 %v968
    %1108 = vmatprep.subr.bf16.mxu0 %v967
    %1109 = vmatpush2.bf16.msra.mxu0 %v966
    %1110 = vmatprep.mubr.bf16.mxu0 %v679
    %1111 = vmatmul.mubr.bf16.gmra.mxu0 %v678
    %v1112 = vpop.f32.mrf.mxu0
    %v1113 = vadd.f32 %v751, %v1112
    %v1114 = vpop.f32.mrf.mxu0
    %v1115 = vadd.f32 %v755, %v1114
    %v1116 = vpop.f32.mrf.mxu0
    %v1117 = vpop.f32.mrf.mxu0
    %1118 = vdwg.mxu0
    %1119 = vmatprep.subr.bf16.mxu0 %v997
    %1120 = vmatpush1.bf16.msra.mxu0 %v996
    %1121 = vmatprep.subr.bf16.mxu0 %v995
    %1122 = vmatpush1.bf16.msra.mxu0 %v994
    %1123 = vmatprep.subr.bf16.mxu0 %v993
    %1124 = vmatpush1.bf16.msra.mxu0 %v992
    %1125 = vmatprep.subr.bf16.mxu0 %v991
    %1126 = vmatpush1.bf16.msra.mxu0 %v990
    %1127 = vmatprep.subr.bf16.mxu0 %v989
    %1128 = vmatpush1.bf16.msra.mxu0 %v988
    %1129 = vmatprep.subr.bf16.mxu0 %v987
    %1130 = vmatpush1.bf16.msra.mxu0 %v986
    %1131 = vmatprep.subr.bf16.mxu0 %v985
    %1132 = vmatpush1.bf16.msra.mxu0 %v984
    %1133 = vmatprep.subr.bf16.mxu0 %v983
    %1134 = vmatpush1.bf16.msra.mxu0 %v982
    %1135 = vmatprep.subr.bf16.mxu0 %v1013
    %1136 = vmatpush2.bf16.msra.mxu0 %v1012
    %1137 = vmatprep.subr.bf16.mxu0 %v1011
    %1138 = vmatpush2.bf16.msra.mxu0 %v1010
    %1139 = vmatprep.subr.bf16.mxu0 %v1009
    %1140 = vmatpush2.bf16.msra.mxu0 %v1008
    %1141 = vmatprep.subr.bf16.mxu0 %v1007
    %1142 = vmatpush2.bf16.msra.mxu0 %v1006
    %1143 = vmatprep.subr.bf16.mxu0 %v1005
    %1144 = vmatpush2.bf16.msra.mxu0 %v1004
    %1145 = vmatprep.subr.bf16.mxu0 %v1003
    %1146 = vmatpush2.bf16.msra.mxu0 %v1002
    %1147 = vmatprep.subr.bf16.mxu0 %v1001
    %1148 = vmatpush2.bf16.msra.mxu0 %v1000
    %1149 = vmatprep.subr.bf16.mxu0 %v999
    %1150 = vmatpush2.bf16.msra.mxu0 %v998
    %1151 = vmatprep.mubr.bf16.mxu0 %v681
    %1152 = vmatmul.mubr.bf16.gmra.mxu0 %v680
    %v1153 = vpop.f32.mrf.mxu0
    %v1154 = vadd.f32 %v1113, %v1153
    %v1155 = vpop.f32.mrf.mxu0
    %v1156 = vadd.f32 %v1115, %v1155
    %v1157 = vpop.f32.mrf.mxu0
    %v1158 = vpop.f32.mrf.mxu0
    %1159 = vdwg.mxu0
    %v1160 = vmax.f32 %v1154, 0.0
    %v1161 = vmax.f32 %v1156, 0.0
    %v1162 = vpack.c.bf16 %v1160, %v1160
    %v1163 = vpack.c.bf16 %v1161, %v1161
    %v1164 = vld [vmem:[#allocation10] sm:$0xf]
    %v1165 = vld [vmem:[#allocation10 + $0x4] sm:$0xf]
    %v1166 = vld [vmem:[#allocation10 + $0x8] sm:$0xf]
    %v1167 = vld [vmem:[#allocation10 + $0xc] sm:$0xf]
    %v1168 = vld [vmem:[#allocation10 + $0x10] sm:$0xf]
    %v1169 = vld [vmem:[#allocation10 + $0x14] sm:$0xf]
    %v1170 = vld [vmem:[#allocation10 + $0x18] sm:$0xf]
    %v1171 = vld [vmem:[#allocation10 + $0x1c] sm:$0xf]
    %v1172 = vld [vmem:[#allocation10 + $0x20] sm:$0xf]
    %v1173 = vld [vmem:[#allocation10 + $0x24] sm:$0xf]
    %v1174 = vld [vmem:[#allocation10 + $0x28] sm:$0xf]
    %v1175 = vld [vmem:[#allocation10 + $0x2c] sm:$0xf]
    %v1176 = vld [vmem:[#allocation10 + $0x30] sm:$0xf]
    %v1177 = vld [vmem:[#allocation10 + $0x34] sm:$0xf]
    %v1178 = vld [vmem:[#allocation10 + $0x38] sm:$0xf]
    %v1179 = vld [vmem:[#allocation10 + $0x3c] sm:$0xf]
    %v1180 = vld [vmem:[#allocation10 + $0x40] sm:$0xf]
    %v1181 = vld [vmem:[#allocation10 + $0x44] sm:$0xf]
    %v1182 = vld [vmem:[#allocation10 + $0x48] sm:$0xf]
    %v1183 = vld [vmem:[#allocation10 + $0x4c] sm:$0xf]
    %v1184 = vld [vmem:[#allocation10 + $0x50] sm:$0xf]
    %v1185 = vld [vmem:[#allocation10 + $0x54] sm:$0xf]
    %v1186 = vld [vmem:[#allocation10 + $0x58] sm:$0xf]
    %v1187 = vld [vmem:[#allocation10 + $0x5c] sm:$0xf]
    %v1188 = vld [vmem:[#allocation10 + $0x60] sm:$0xf]
    %v1189 = vld [vmem:[#allocation10 + $0x64] sm:$0xf]
    %v1190 = vld [vmem:[#allocation10 + $0x68] sm:$0xf]
    %v1191 = vld [vmem:[#allocation10 + $0x6c] sm:$0xf]
    %v1192 = vld [vmem:[#allocation10 + $0x70] sm:$0xf]
    %v1193 = vld [vmem:[#allocation10 + $0x74] sm:$0xf]
    %v1194 = vld [vmem:[#allocation10 + $0x78] sm:$0xf]
    %v1195 = vld [vmem:[#allocation10 + $0x7c] sm:$0xf]
    %v1196 = vld [vmem:[%s8] sm:$0x1]
    %v1198 = vlaneseq
    %v1199 = vshrl.u32 %v1198, 7
    %v1200 = vsub.s32 0, %v1199
    %v1201 = vrot.slane %v1196, %v1200
    %v1235 = vunpack.c.l.b16 %v1164
    %v1236 = vunpack.c.l.b16 %v1165
    %v1237 = vunpack.c.l.b16 %v1166
    %v1238 = vunpack.c.l.b16 %v1167
    %v1239 = vunpack.c.l.b16 %v1168
    %v1240 = vunpack.c.l.b16 %v1169
    %v1241 = vunpack.c.l.b16 %v1170
    %v1242 = vunpack.c.l.b16 %v1171
    %v1243 = vunpack.c.l.b16 %v1172
    %v1244 = vunpack.c.l.b16 %v1173
    %v1245 = vunpack.c.l.b16 %v1174
    %v1246 = vunpack.c.l.b16 %v1175
    %v1247 = vunpack.c.l.b16 %v1176
    %v1248 = vunpack.c.l.b16 %v1177
    %v1249 = vunpack.c.l.b16 %v1178
    %v1250 = vunpack.c.l.b16 %v1179
    %v1251 = vunpack.c.l.b16 %v1180
    %v1252 = vunpack.c.l.b16 %v1181
    %v1253 = vunpack.c.l.b16 %v1182
    %v1254 = vunpack.c.l.b16 %v1183
    %v1255 = vunpack.c.l.b16 %v1184
    %v1256 = vunpack.c.l.b16 %v1185
    %v1257 = vunpack.c.l.b16 %v1186
    %v1258 = vunpack.c.l.b16 %v1187
    %v1259 = vunpack.c.l.b16 %v1188
    %v1260 = vunpack.c.l.b16 %v1189
    %v1261 = vunpack.c.l.b16 %v1190
    %v1262 = vunpack.c.l.b16 %v1191
    %v1263 = vunpack.c.l.b16 %v1192
    %v1264 = vunpack.c.l.b16 %v1193
    %v1265 = vunpack.c.l.b16 %v1194
    %v1266 = vunpack.c.l.b16 %v1195
    %v1267 = vpack.c.b16 %v1236, %v1235
    %v1268 = vpack.c.b16 %v1238, %v1237
    %v1269 = vpack.c.b16 %v1240, %v1239
    %v1270 = vpack.c.b16 %v1242, %v1241
    %v1271 = vpack.c.b16 %v1244, %v1243
    %v1272 = vpack.c.b16 %v1246, %v1245
    %v1273 = vpack.c.b16 %v1248, %v1247
    %v1274 = vpack.c.b16 %v1250, %v1249
    %v1275 = vpack.c.b16 %v1252, %v1251
    %v1276 = vpack.c.b16 %v1254, %v1253
    %v1277 = vpack.c.b16 %v1256, %v1255
    %v1278 = vpack.c.b16 %v1258, %v1257
    %v1279 = vpack.c.b16 %v1260, %v1259
    %v1280 = vpack.c.b16 %v1262, %v1261
    %v1281 = vpack.c.b16 %v1264, %v1263
    %v1282 = vpack.c.b16 %v1266, %v1265
    %1299 = vmatprep.subr.bf16.mxu0 0
    %1300 = vmatpush1.bf16.msra.mxu0 %v1274
    %1301 = vmatprep.subr.bf16.mxu0 0
    %1302 = vmatpush1.bf16.msra.mxu0 %v1273
    %1303 = vmatprep.subr.bf16.mxu0 0
    %1304 = vmatpush1.bf16.msra.mxu0 %v1272
    %1305 = vmatprep.subr.bf16.mxu0 0
    %1306 = vmatpush1.bf16.msra.mxu0 %v1271
    %1307 = vmatprep.subr.bf16.mxu0 0
    %1308 = vmatpush1.bf16.msra.mxu0 %v1270
    %1309 = vmatprep.subr.bf16.mxu0 0
    %1310 = vmatpush1.bf16.msra.mxu0 %v1269
    %1311 = vmatprep.subr.bf16.mxu0 0
    %1312 = vmatpush1.bf16.msra.mxu0 %v1268
    %1313 = vmatprep.subr.bf16.mxu0 0
    %1314 = vmatpush1.bf16.msra.mxu0 %v1267
    %1315 = vmatprep.subr.bf16.mxu0 0
    %1316 = vmatpush2.bf16.msra.mxu0 %v1282
    %1317 = vmatprep.subr.bf16.mxu0 0
    %1318 = vmatpush2.bf16.msra.mxu0 %v1281
    %1319 = vmatprep.subr.bf16.mxu0 0
    %1320 = vmatpush2.bf16.msra.mxu0 %v1280
    %1321 = vmatprep.subr.bf16.mxu0 0
    %1322 = vmatpush2.bf16.msra.mxu0 %v1279
    %1323 = vmatprep.subr.bf16.mxu0 0
    %1324 = vmatpush2.bf16.msra.mxu0 %v1278
    %1325 = vmatprep.subr.bf16.mxu0 0
    %1326 = vmatpush2.bf16.msra.mxu0 %v1277
    %1327 = vmatprep.subr.bf16.mxu0 0
    %1328 = vmatpush2.bf16.msra.mxu0 %v1276
    %1329 = vmatprep.subr.bf16.mxu0 0
    %1330 = vmatpush2.bf16.msra.mxu0 %v1275
    %1331 = vmatprep.mubr.bf16.mxu0 %v1163
    %1332 = vmatmul.mubr.bf16.gmra.mxu0 %v1162
    %v1333 = vpop.f32.mrf.mxu0
    %v1334 = vadd.f32 %v1201, %v1333
    %v1335 = vpop.f32.mrf.mxu0
    %v1336 = vpop.f32.mrf.mxu0
    %v1337 = vpop.f32.mrf.mxu0
    %1338 = vdwg.mxu0
    %1339 = vst [vmem:[#allocation11] sm:$0xff] %v1334
    // Predicated region
    $region58: #{tpu_custom_call.1} parent=1 // pred_check
      _
    $region59: #{tpu_custom_call.1} parent=1 // pred_check_branch
      %1341 = sbr.rel (0) target = $region61
    $region60: #{tpu_custom_call.1} parent=1 // pred_region
      %s1343 = ssub.s32 128, 128
      %1344 = vsyncadd [#allocation4], %s1343
      %s1346 = sshll.u32 [#allocation11], 4
      %s1347 = int_to_ptr.vmem [resolvable:$true] %s1346
      %1349 = dma.vmem_to_hbm [thread:$0]  %s1347, 128, %s9, [#allocation4]
    $region61: #{tpu_custom_call.1} parent=1 // pred_fallthru
      _
    // Predicated region
    $region62: #{tpu_custom_call.1} parent=1 // pred_check
      _
    $region63: #{tpu_custom_call.1} parent=1 // pred_check_branch
      %1351 = sbr.rel (0) target = $region65
    $region64: #{tpu_custom_call.1} parent=1 // pred_region
      %1352 = dma.done [#allocation4], 128
    $region65: #{tpu_custom_call.1} parent=1 // pred_fallthru
      _
    %1353 = vsyncpa [#allocation3], 1
    %1354 = vsyncpa [#allocation6], 1
    %1355 = vsyncpa [#allocation9], 1
    %1356 = vsyncpa [#allocation4], 1

</llo_original>
